<compile_context>
chip_gen: v7x
topology: tpu7x:2x2x1
jax: 0.10.0
libtpu: 0.0.40
codegen_flags: <defaults>
</compile_context>

<pallas_src>
import math

import jax
import jax.numpy as jnp
from jax.experimental import pallas as pl
from jax.experimental.pallas import tpu as pltpu


def _make_dice_kernel(C: int, HW: int, t_hw: int, j_inner: int,
                      multiclass: bool, needs_mask: bool, compute_dtype):
    def kernel(x_ref, t_ref, out_ref):
        o = pl.program_id(1)
        ji = pl.program_id(2)

        @pl.when(ji == 0)
        def _init():
            out_ref[...] = jnp.zeros_like(out_ref)

        def accumulate(masked: bool):
            x = x_ref[0].astype(compute_dtype)                 # (C, t_hw)
            if masked:
                lane = jax.lax.broadcasted_iota(jnp.int32, (1, t_hw), 1)
                start = (o * j_inner + ji) * t_hw
                valid = (start + lane) < HW                    # (1, t_hw)
                # Zero padded lanes *before* exp/sigmoid so garbage in the
                # partial block never becomes NaN/Inf (NaN * 0 == NaN).
                x = jnp.where(valid, x, jnp.zeros_like(x))

            if multiclass:
                # softmax over channels (sublane axis, C rows)
                m = jnp.max(x, axis=0, keepdims=True)
                e = jnp.exp(x - m)
                denom = jnp.sum(e, axis=0, keepdims=True).astype(jnp.float32)
                inv = pl.reciprocal(denom, approx=True).astype(compute_dtype)
                probs = e * inv                                # (C, t_hw)
                # one-hot of integer labels (== torch scatter_ on dim=1);
                # labels streamed at native narrow width, widened in-kernel.
                labels = t_ref[0].astype(jnp.int32)            # (1, t_hw)
                ch = jax.lax.broadcasted_iota(jnp.int32, (C, t_hw), 0)
                targ = (labels == ch).astype(compute_dtype)    # (C, t_hw)
            else:
                probs = jax.nn.sigmoid(x)                      # (1, t_hw)
                targ = t_ref[0].astype(compute_dtype)          # (1, t_hw)

            if masked:
                vmask = valid.astype(compute_dtype)
                probs = probs * vmask
                targ = targ * vmask

            # per-step lane reduction (f32 accumulate) straight into the
            # resident output block -- no full-tile scratch, no finalize.
            inter = jnp.sum((probs * targ).astype(jnp.float32),
                            axis=1, keepdims=True)             # (C, 1)
            psum = jnp.sum(probs.astype(jnp.float32), axis=1, keepdims=True)
            tsum = jnp.sum(targ.astype(jnp.float32), axis=1, keepdims=True)
            upd = jnp.concatenate([inter, psum, tsum], axis=1) # (C, 3) tiny
            out_ref[...] += upd[None, None]                    # (1, 1, C, 3)

        if needs_mask:
            is_tail = jnp.logical_and(o == pl.num_programs(1) - 1,
                                      ji == pl.num_programs(2) - 1)

            @pl.when(is_tail)
            def _tail():
                accumulate(True)

            @pl.when(jnp.logical_not(is_tail))
            def _fast():
                accumulate(False)
        else:
            accumulate(False)

    return kernel


def dice_loss(logits, targets, *, smooth: float = 1e-7,
              max_block_lanes=None, spatial_splits=None):
    """Pallas DiceLoss forward.

    logits:  (N, C, *spatial), NCHW, streamed in its native dtype.
    targets: (N, *spatial) integer labels if C > 1 (any int width), else a
             0/1 mask of shape (N, *spatial) or (N, 1, *spatial) in any
             float/uint/bool dtype -- streamed as-is, cast in-kernel.
    """
    N = logits.shape[0]
    C = logits.shape[1]
    HW = math.prod(logits.shape[2:])
    multiclass = C > 1

    # free reshapes only (no transpose / no extra HBM pass)
    x = logits.reshape(N, C, HW)
    t = targets.reshape(N, 1, HW)
    if t.dtype == jnp.bool_:
        t = t.astype(jnp.uint8)       # still 1 B/pixel; avoids bool-block corner cases

    # --- lane-dense spatial tile: multiple of 128, ~2 MiB f32-equivalent of
    # logits per block.  With the big scratch gone, double-buffered inputs
    # plus in-step temporaries stay well inside a 32 MiB scoped-VMEM limit on
    # v5e/v6e/v7x while still amortizing the ~0.35 us per-grid-step overhead.
    if max_block_lanes is None:
        target_bytes = 2 * 1024 * 1024
        max_block_lanes = max(512, (target_bytes // max(1, C * 4)) // 128 * 128)
    if HW <= max_block_lanes:
        t_hw = HW                      # single full-extent block (always legal)
    else:
        t_hw = (max_block_lanes // 128) * 128
    num_j = pl.cdiv(HW, t_hw)
    needs_mask = (HW % t_hw) != 0      # only the last block is partial

    # Optional outer "parallel" spatial axis: lets v7x split single-image
    # (N == 1) calls across its two TensorCores; harmless elsewhere.
    if spatial_splits is None:
        spatial_splits = 2 if (N == 1 and num_j >= 2 and num_j % 2 == 0) else 1
    n_outer = spatial_splits if (spatial_splits >= 1 and num_j % spatial_splits == 0) else 1
    j_inner = num_j // n_outer

    # bf16 logits keep elementwise math in bf16 (v6e/v7x bf16 VPU/EUP).
    compute_dtype = jnp.bfloat16 if x.dtype == jnp.bfloat16 else jnp.float32

    kernel = _make_dice_kernel(C, HW, t_hw, j_inner, multiclass, needs_mask,
                               compute_dtype)

    partials = pl.pallas_call(
        kernel,
        out_shape=jax.ShapeDtypeStruct((N, n_outer, C, 3), jnp.float32),
        grid_spec=pltpu.PrefetchScalarGridSpec(
            num_scalar_prefetch=0,
            grid=(N, n_outer, j_inner),
            in_specs=[
                pl.BlockSpec((1, C, t_hw),
                             lambda n, o, j: (n, 0, o * j_inner + j)),
                pl.BlockSpec((1, 1, t_hw),
                             lambda n, o, j: (n, 0, o * j_inner + j)),
            ],
            out_specs=pl.BlockSpec((1, 1, C, 3),
                                   lambda n, o, j: (n, o, 0, 0)),
        ),
        compiler_params=pltpu.CompilerParams(
            dimension_semantics=("parallel", "parallel", "arbitrary"),
            vmem_limit_bytes=32 * 1024 * 1024),
    )(x, t)

    # tiny scalar epilogue in plain JAX: sum per-(batch, spatial-split) partials
    sums = jnp.sum(partials, axis=(0, 1))               # (C, 3)
    inter, psum, tsum = sums[:, 0], sums[:, 1], sums[:, 2]
    dice = jnp.mean(2.0 * inter / (psum + tsum + smooth))
    return -jnp.log(dice + 1e-7)


def dice_loss_ref(logits, targets, smooth: float = 1e-7):
    """Pure-JAX reference matching the PyTorch module."""
    if logits.shape[1] == 1:
        probs = jax.nn.sigmoid(logits)
        if targets.ndim == probs.ndim - 1:
            targets = targets[:, None]
        targ = targets.astype(jnp.float32)
    else:
        probs = jax.nn.softmax(logits, axis=1)
        targ = jax.nn.one_hot(targets, logits.shape[1], axis=1,
                              dtype=jnp.float32)
    axes = (0,) + tuple(range(2, probs.ndim))
    inter = (probs * targ).sum(axes)
    union = probs.sum(axes) + targ.sum(axes)
    dice = jnp.mean(2.0 * inter / (union + smooth))
    return -jnp.log(dice + 1e-7)


if __name__ == "__main__":
    key = jax.random.PRNGKey(0)
    k1, k2, k3, k4, k5, k6, k7, k8 = jax.random.split(key, 8)

    # --- multi-class branch: N=2, C=4, H=W=16, narrow (int8) labels ---
    logits_mc = jax.random.normal(k1, (2, 4, 16, 16), dtype=jnp.float32)
    labels_mc = jax.random.randint(k2, (2, 16, 16), 0, 4,
                                   dtype=jnp.int32).astype(jnp.int8)
    out_mc = dice_loss(logits_mc, labels_mc)
    ref_mc = dice_loss_ref(logits_mc, labels_mc)

    # --- binary branch: N=2, C=1, H=W=16, float 0/1 mask ---
    logits_bin = jax.random.normal(k3, (2, 1, 16, 16), dtype=jnp.float32)
    mask_bin = (jax.random.uniform(k4, (2, 16, 16)) > 0.5).astype(jnp.float32)
    out_bin = dice_loss(logits_bin, mask_bin)
    ref_bin = dice_loss_ref(logits_bin, mask_bin)

    # --- multi-block + gated tail-mask path: H*W=300, 128-lane tiles ---
    logits_tail = jax.random.normal(k5, (2, 3, 10, 30), dtype=jnp.float32)
    labels_tail = jax.random.randint(k6, (2, 10, 30), 0, 3,
                                     dtype=jnp.int32).astype(jnp.int8)
    out_tail = dice_loss(logits_tail, labels_tail, max_block_lanes=128)
    ref_tail = dice_loss_ref(logits_tail, labels_tail)

    # --- N=1: outer "parallel" spatial split (2 x 1 blocks, v7x dual-TC path) ---
    logits_sp = jax.random.normal(k7, (1, 3, 16, 16), dtype=jnp.float32)
    labels_sp = jax.random.randint(k8, (1, 16, 16), 0, 3,
                                   dtype=jnp.int32).astype(jnp.int8)
    out_sp = dice_loss(logits_sp, labels_sp, max_block_lanes=128)
    ref_sp = dice_loss_ref(logits_sp, labels_sp)

    jax.block_until_ready((out_mc, out_bin, out_tail, out_sp))

    # approx EUP reciprocal in the softmax changes numerics slightly, so the
    # softmax-path tolerances are loosened; the sigmoid path stays tight.
    assert jnp.allclose(out_mc, ref_mc, rtol=1e-2, atol=1e-2), (out_mc, ref_mc)
    assert jnp.allclose(out_bin, ref_bin, rtol=1e-4, atol=1e-4), (out_bin, ref_bin)
    assert jnp.allclose(out_tail, ref_tail, rtol=1e-2, atol=1e-2), (out_tail, ref_tail)
    assert jnp.allclose(out_sp, ref_sp, rtol=1e-2, atol=1e-2), (out_sp, ref_sp)
    print("KERNEL_OK")
</pallas_src>

<mosaic_0001>
module attributes {stable_mosaic.version = 11 : i64} {
  func.func @kernel(%arg0: i32, %arg1: i32, %arg2: i32, %arg3: memref<1x4x256xf32, #tpu.memory_space<vmem>>, %arg4: memref<1x1x256xi8, #tpu.memory_space<vmem>>, %arg5: memref<1x1x4x3xf32, #tpu.memory_space<vmem>>) attributes {dimension_semantics = [#tpu.dimension_semantics<parallel>, #tpu.dimension_semantics<parallel>, #tpu.dimension_semantics<arbitrary>], iteration_bounds = array<i64: 2, 1, 1>, scalar_prefetch = 0 : i64, scratch_operands = 0 : i64, tpu.core_type = #tpu.core_type<tc>, window_params = [{transform_indices = @transform_0, window_bounds = array<i64: 1, 4, 256>}, {transform_indices = @transform_1, window_bounds = array<i64: 1, 1, 256>}, {transform_indices = @transform_2, window_bounds = array<i64: 1, 1, 4, 3>}]} {
    %c0_i32 = arith.constant 0 : i32
    %0 = arith.cmpi eq, %arg2, %c0_i32 : i32
    %1 = arith.extui %0 : i1 to i32
    %c0_i32_0 = arith.constant 0 : i32
    %2 = arith.cmpi ne, %1, %c0_i32_0 : i32
    scf.if %2 {
      %cst_18 = arith.constant 0.000000e+00 : f32
      %35 = vector.broadcast %cst_18 : f32 to vector<1x1x4x3xf32>
      %c0_19 = arith.constant 0 : index
      %c0_20 = arith.constant 0 : index
      %c0_21 = arith.constant 0 : index
      %c0_22 = arith.constant 0 : index
      %36 = vector.load %arg5[%c0_19, %c0_20, %c0_21, %c0_22] : memref<1x1x4x3xf32, #tpu.memory_space<vmem>>, vector<1x1x4x3xf32>
      tpu.vector_store %arg5[%c0_19, %c0_20, %c0_21, %c0_22], %35 {strides = array<i32>} : memref<1x1x4x3xf32, #tpu.memory_space<vmem>>, vector<1x1x4x3xf32>,
    } else {
    }
    %c0 = arith.constant 0 : index
    %c0_1 = arith.constant 0 : index
    %c0_2 = arith.constant 0 : index
    %3 = vector.load %arg3[%c0, %c0_1, %c0_2] : memref<1x4x256xf32, #tpu.memory_space<vmem>>, vector<1x4x256xf32>
    %4 = vector.shape_cast %3 : vector<1x4x256xf32> to vector<4x256xf32>
    %cst = arith.constant dense<0xFF800000> : vector<256xf32>
    %5 = vector.multi_reduction <maximumf>, %4, %cst [0] : vector<4x256xf32> to vector<256xf32>
    %6 = vector.shape_cast %5 : vector<256xf32> to vector<1x256xf32>
    %7 = vector.broadcast %6 : vector<1x256xf32> to vector<4x256xf32>
    %8 = arith.subf %4, %7 : vector<4x256xf32>
    %9 = math.exp %8 : vector<4x256xf32>
    %cst_3 = arith.constant dense<0.000000e+00> : vector<256xf32>
    %10 = vector.multi_reduction <add>, %9, %cst_3 [0] : vector<4x256xf32> to vector<256xf32>
    %11 = vector.shape_cast %10 : vector<256xf32> to vector<1x256xf32>
    %12 = tpu.reciprocal %11 {approx = true} : vector<1x256xf32> -> vector<1x256xf32>
    %13 = vector.broadcast %12 : vector<1x256xf32> to vector<4x256xf32>
    %14 = arith.mulf %9, %13 : vector<4x256xf32>
    %c0_4 = arith.constant 0 : index
    %c0_5 = arith.constant 0 : index
    %c0_6 = arith.constant 0 : index
    %15 = vector.load %arg4[%c0_4, %c0_5, %c0_6] : memref<1x1x256xi8, #tpu.memory_space<vmem>>, vector<1x1x256xi8>
    %16 = vector.shape_cast %15 : vector<1x1x256xi8> to vector<1x256xi8>
    %17 = arith.extsi %16 : vector<1x256xi8> to vector<1x256xi32>
    %18 = tpu.iota {dimensions = array<i32: 0>} : vector<4x256xi32>
    %19 = vector.broadcast %17 : vector<1x256xi32> to vector<4x256xi32>
    %20 = arith.cmpi eq, %19, %18 : vector<4x256xi32>
    %21 = arith.extui %20 : vector<4x256xi1> to vector<4x256xi32>
    %22 = arith.sitofp %21 : vector<4x256xi32> to vector<4x256xf32>
    %23 = arith.mulf %14, %22 : vector<4x256xf32>
    %cst_7 = arith.constant dense<0.000000e+00> : vector<4xf32>
    %24 = vector.multi_reduction <add>, %23, %cst_7 [1] : vector<4x256xf32> to vector<4xf32>
    %25 = vector.shape_cast %24 : vector<4xf32> to vector<4x1xf32>
    %cst_8 = arith.constant dense<0.000000e+00> : vector<4xf32>
    %26 = vector.multi_reduction <add>, %14, %cst_8 [1] : vector<4x256xf32> to vector<4xf32>
    %27 = vector.shape_cast %26 : vector<4xf32> to vector<4x1xf32>
    %cst_9 = arith.constant dense<0.000000e+00> : vector<4xf32>
    %28 = vector.multi_reduction <add>, %22, %cst_9 [1] : vector<4x256xf32> to vector<4xf32>
    %29 = vector.shape_cast %28 : vector<4xf32> to vector<4x1xf32>
    %30 = tpu.concatenate %25, %27, %29 in 1 : vector<4x1xf32>, vector<4x1xf32>, vector<4x1xf32> -> vector<4x3xf32>
    %c0_10 = arith.constant 0 : index
    %c0_11 = arith.constant 0 : index
    %c0_12 = arith.constant 0 : index
    %c0_13 = arith.constant 0 : index
    %31 = vector.load %arg5[%c0_10, %c0_11, %c0_12, %c0_13] : memref<1x1x4x3xf32, #tpu.memory_space<vmem>>, vector<1x1x4x3xf32>
    %32 = vector.shape_cast %30 : vector<4x3xf32> to vector<1x1x4x3xf32>
    %33 = arith.addf %31, %32 : vector<1x1x4x3xf32>
    %c0_14 = arith.constant 0 : index
    %c0_15 = arith.constant 0 : index
    %c0_16 = arith.constant 0 : index
    %c0_17 = arith.constant 0 : index
    %34 = vector.load %arg5[%c0_14, %c0_15, %c0_16, %c0_17] : memref<1x1x4x3xf32, #tpu.memory_space<vmem>>, vector<1x1x4x3xf32>
    tpu.vector_store %arg5[%c0_14, %c0_15, %c0_16, %c0_17], %33 {strides = array<i32>} : memref<1x1x4x3xf32, #tpu.memory_space<vmem>>, vector<1x1x4x3xf32>,
    return
  }
  func.func @transform_0(%arg0: i32, %arg1: i32, %arg2: i32) -> (i32, i32, i32) {
    %c1_i32 = arith.constant 1 : i32
    %0 = arith.muli %arg1, %c1_i32 : i32
    %1 = arith.addi %0, %arg2 : i32
    %c0_i32 = arith.constant 0 : i32
    %c0_i32_0 = arith.constant 0 : i32
    return %arg0, %c0_i32, %1 : i32, i32, i32
  }
  func.func @transform_1(%arg0: i32, %arg1: i32, %arg2: i32) -> (i32, i32, i32) {
    %c1_i32 = arith.constant 1 : i32
    %0 = arith.muli %arg1, %c1_i32 : i32
    %1 = arith.addi %0, %arg2 : i32
    %c0_i32 = arith.constant 0 : i32
    %c0_i32_0 = arith.constant 0 : i32
    return %arg0, %c0_i32, %1 : i32, i32, i32
  }
  func.func @transform_2(%arg0: i32, %arg1: i32, %arg2: i32) -> (i32, i32, i32, i32) {
    %c0_i32 = arith.constant 0 : i32
    %c0_i32_0 = arith.constant 0 : i32
    %c0_i32_1 = arith.constant 0 : i32
    return %arg0, %arg1, %c0_i32, %c0_i32_0 : i32, i32, i32, i32
  }
}

</mosaic_0001>

<llo_original>
// kernel: tpu_custom_call.1
$region0: #{tpu_custom_call.1}
  #allocation0 [shape = 'u32[]', space=smem, size = 0x4, offset = 0x4, fixed_abs, tag = 'smem constant byte address 0x4 - core index']
  #allocation1 [shape = 'u32[144,128]{1,0:T(1,128)}', space=vmem, size = 0x12000, scoped, tag = 'internal scratch']
  %s0 = inlined_call_operand.hbm [shape: f32[2,4,256], index: 0, kind: input, shape index: {}]
  %s1 = inlined_call_operand.vmem [shape: s8[2,1,256], index: 1, kind: input, shape index: {}]
  %s2 = inlined_call_operand.vmem [shape: f32[2,1,4,3], index: 2, kind: output, shape index: {}]
  %s3 = sld [smem:[#allocation0]]
  $region49: #{tpu_custom_call.1} parent=0
    _
  %s5 = ssub.s32 1, %s3
  %s6 = scalar_select 0, %s5, %s3
  $region1: #{tpu_custom_call.1} parent=0
    #allocation2 [shape = 'u8[8192]{0}', space=vmem, size = 0x2000, scoped, tag = 'input window, operand 0']
    #allocation3 [shape = 's32[2]{0}', space=sflag, size = 0x8, scoped, tag = 'scoped memory for tpu_custom_call.1']
    %7 = vsyncpa [#allocation3], 0
    %s8 = scalar_lea.sflag [#allocation3], 1
    %9 = vsyncpa %s8, 0
    loop: start=0, step=1, limit=4
    $region2: #{tpu_custom_call.1} parent=1 // loop_pre_header
      _
    $region3: #{tpu_custom_call.1} parent=1 // loop_header
      %s11 = sphi 0, %s15
      %p12 = scmp.ge.s32.totalorder %s11, 4
      %s18 = sphi 0, %s37
      %s19 = sphi 0, %s33
      %s20 = sphi 0, %s29
      %s21 = sphi 0, %s18
      %s22 = sphi 0, %s19
      %s23 = sphi 0, %s20
      %s24 = sphi 0, %s21
      %s25 = sphi 0, %s22
      %s26 = sphi 0, %s23
      %s44 = sphi 0, %s46
      %s47 = sphi 0, %s44
      %s48 = sphi 0, %s47
      %s64 = sphi 0, %s48
      %s74 = sphi 0, %s76
      %s77 = sphi 0, %s74
      %s78 = sphi 0, %s77
      %s94 = sphi 0, %s78
      %s102 = sphi 0, %s104
      %s105 = sphi 0, %s102
      %s106 = sphi 0, %s105
      %s122 = sphi 0, %s106
    $region4: #{tpu_custom_call.1} parent=1 // loop_header_branch
      %14 = sbr.rel (%p12) target = $region8
    $region5: #{tpu_custom_call.1} parent=1 // loop_body
      %s16 = ssub.s32 %s11, 1
      %s17 = ssub.s32 %s11, 2
      %s27 = sadd.s32 1, %s20
      %p28 = scmp.ge.s32.totalorder %s27, 1
      %s29 = scalar_select %p28, 0, %s27
      %s30 = sadd.s32 1, %s19
      %s31 = scalar_select %p28, %s30, %s19
      %p32 = scmp.ge.s32.totalorder %s31, 1
      %s33 = scalar_select %p32, 0, %s31
      %s34 = sadd.s32 1, %s18
      %s35 = scalar_select %p32, %s34, %s18
      %p36 = scmp.ge.s32.totalorder %s35, 2
      %s37 = scalar_select %p36, 0, %s35
      %s38 = sadd.s32 %s19, %s20
      %s39 = sadd.s32 %s33, %s29
      %s40 = ssub.s32 %s18, %s37
      %s41 = ssub.s32 %s38, %s39
      %s42 = sor.u32 %s40, %s41
      %p43 = scmp.eq.s32.totalorder %s42, 0
      %s45 = sadd.s32 %s44, 1
      %s46 = scalar_select %p43, %s44, %s45
      %p49 = pneg %p43
      %p50 = scmp.eq.s32.totalorder %s11, 1
      %p51 = por %p49, %p50
      %p52 = scmp.ne.s32.totalorder %s44, %s47
      %p53 = scmp.eq.s32.totalorder %s11, 0
      %p54 = por %p52, %p53
      %p55 = scmp.ne.s32.totalorder %s44, %s47
      %p56 = scmp.eq.s32.totalorder %s16, 1
      %p57 = por %p55, %p56
      %p58 = scmp.ne.s32.totalorder %s47, %s48
      %p59 = scmp.eq.s32.totalorder %s16, 0
      %p60 = por %p58, %p59
      %p61 = scmp.ne.s32.totalorder %s47, %s48
      %p62 = scmp.eq.s32.totalorder %s17, 1
      %p63 = por %p61, %p62
      %p65 = scmp.ne.s32.totalorder %s48, %s64
      %p66 = scmp.eq.s32.totalorder %s17, 0
      %p67 = por %p65, %p66
      %s68 = sadd.s32 %s19, %s20
      %s69 = sadd.s32 %s33, %s29
      %s70 = ssub.s32 %s18, %s37
      %s71 = ssub.s32 %s68, %s69
      %s72 = sor.u32 %s70, %s71
      %p73 = scmp.eq.s32.totalorder %s72, 0
      %s75 = sadd.s32 %s74, 1
      %s76 = scalar_select %p73, %s74, %s75
      %p79 = pneg %p73
      %p80 = scmp.eq.s32.totalorder %s11, 1
      %p81 = por %p79, %p80
      %p82 = scmp.ne.s32.totalorder %s74, %s77
      %p83 = scmp.eq.s32.totalorder %s11, 0
      %p84 = por %p82, %p83
      %p85 = scmp.ne.s32.totalorder %s74, %s77
      %p86 = scmp.eq.s32.totalorder %s16, 1
      %p87 = por %p85, %p86
      %p88 = scmp.ne.s32.totalorder %s77, %s78
      %p89 = scmp.eq.s32.totalorder %s16, 0
      %p90 = por %p88, %p89
      %p91 = scmp.ne.s32.totalorder %s77, %s78
      %p92 = scmp.eq.s32.totalorder %s17, 1
      %p93 = por %p91, %p92
      %p95 = scmp.ne.s32.totalorder %s78, %s94
      %p96 = scmp.eq.s32.totalorder %s17, 0
      %p97 = por %p95, %p96
      %s98 = ssub.s32 %s18, %s37
      %s99 = ssub.s32 %s19, %s33
      %s100 = sor.u32 %s98, %s99
      %p101 = scmp.eq.s32.totalorder %s100, 0
      %s103 = sadd.s32 %s102, 1
      %s104 = scalar_select %p101, %s102, %s103
      %p107 = pneg %p101
      %p108 = scmp.eq.s32.totalorder %s11, 1
      %p109 = por %p107, %p108
      %p110 = scmp.ne.s32.totalorder %s102, %s105
      %p111 = scmp.eq.s32.totalorder %s11, 0
      %p112 = por %p110, %p111
      %p113 = scmp.ne.s32.totalorder %s102, %s105
      %p114 = scmp.eq.s32.totalorder %s16, 1
      %p115 = por %p113, %p114
      %p116 = scmp.ne.s32.totalorder %s105, %s106
      %p117 = scmp.eq.s32.totalorder %s16, 0
      %p118 = por %p116, %p117
      %p119 = scmp.ne.s32.totalorder %s105, %s106
      %p120 = scmp.eq.s32.totalorder %s17, 1
      %p121 = por %p119, %p120
      %p123 = scmp.ne.s32.totalorder %s106, %s122
      %p124 = scmp.eq.s32.totalorder %s17, 0
      %p125 = por %p123, %p124
      %p126 = scmp.le.s32.totalorder 1, %s11
      %p127 = scmp.lt.s32.totalorder %s11, 3
      %p128 = pnand %p126, %p127
      %p129 = pneg %p128
      // Predicated region
      $region9: #{tpu_custom_call.1} parent=5 // pred_check
        _
      $region10: #{tpu_custom_call.1} parent=5 // pred_check_branch
        %131 = sbr.rel (%p128) target = $region12
      $region11: #{tpu_custom_call.1} parent=5 // pred_region
        %s132 = ssub.s32 %s11, 1
      $region12: #{tpu_custom_call.1} parent=5 // pred_fallthru
        _
      %p133 = scmp.lt.s32.totalorder %s11, 2
      // Predicated region
      $region13: #{tpu_custom_call.1} parent=5 // pred_check
        %p134 = pneg %p133
      $region14: #{tpu_custom_call.1} parent=5 // pred_check_branch
        %136 = sbr.rel (%p134) target = $region16
      $region15: #{tpu_custom_call.1} parent=5 // pred_region
        // Predicated region
        $region17: #{tpu_custom_call.1} parent=15 // pred_check
          %p137 = pneg %p54
        $region18: #{tpu_custom_call.1} parent=15 // pred_check_branch
          %139 = sbr.rel (%p137) target = $region20
        $region19: #{tpu_custom_call.1} parent=15 // pred_region
          %s140 = sand.u32 %s44, 1
          %s141 = scalar_lea.sflag [#allocation3], %s140
          %s142 = sand.u32 %s44, 1
          %s143 = smul.addr %s142, 8
          %s144 = scalar_lea.vmem [#allocation2], %s143
          %s145 = sadd.s32 %s19, %s20
          %s146 = smul.u32 2, %s145
          %s148 = ssub.s32 128, 128
          %149 = vsyncadd %s141, %s148
          %s150 = smul.addr %s18, 2
          %s151 = sadd.s32 %s146, %s150
          %s152 = smul.addr %s151, 64
          %s153 = scalar_lea.hbm %s0, %s152
          %s155 = sshll.u32 %s144, 4
          %s156 = int_to_ptr.vmem [resolvable:$true] %s155
          %158 = dma.hbm_to_vmem [thread:$0]  %s153, 128, %s156, %s141
        $region20: #{tpu_custom_call.1} parent=15 // pred_fallthru
          _
        // Predicated region
        $region21: #{tpu_custom_call.1} parent=15 // pred_check
          %p159 = pneg %p84
        $region22: #{tpu_custom_call.1} parent=15 // pred_check_branch
          %161 = sbr.rel (%p159) target = $region24
        $region23: #{tpu_custom_call.1} parent=15 // pred_region
          %s162 = sadd.s32 %s19, %s20
          %s163 = smul.u32 2, %s162
          %p164 = scmp.lt.s32.totalorder %s18, 1
          %s165 = scalar_select %p164, %s18, 1
          %p166 = scmp.lt.s32.totalorder %s163, 1
          %s167 = scalar_select %p166, %s163, 1
          %s168 = smul.addr %s165, 2
          %s169 = sadd.s32 %s167, %s168
          %s170 = scalar_lea.vmem %s1, %s169
          %s171 = sadd.s32 %s19, %s20
          %s172 = smul.u32 2, %s171
        $region24: #{tpu_custom_call.1} parent=15 // pred_fallthru
          _
      $region16: #{tpu_custom_call.1} parent=5 // pred_fallthru
        _
      %p173 = scmp.le.s32.totalorder 1, %s11
      %p174 = scmp.lt.s32.totalorder %s11, 3
      %p175 = pnand %p173, %p174
      %p176 = pneg %p175
      // Predicated region
      $region25: #{tpu_custom_call.1} parent=5 // pred_check
        _
      $region26: #{tpu_custom_call.1} parent=5 // pred_check_branch
        %178 = sbr.rel (%p175) target = $region28
      $region27: #{tpu_custom_call.1} parent=5 // pred_region
        %s179 = ssub.s32 %s11, 1
        %s180 = sand.u32 %s47, 1
        %s181 = scalar_lea.sflag [#allocation3], %s180
        %s182 = sand.u32 %s47, 1
        %s183 = smul.addr %s182, 8
        %s184 = scalar_lea.vmem [#allocation2], %s183
        // Predicated region
        $region29: #{tpu_custom_call.1} parent=27 // pred_check
          %p185 = pneg %p60
        $region30: #{tpu_custom_call.1} parent=27 // pred_check_branch
          %187 = sbr.rel (%p185) target = $region32
        $region31: #{tpu_custom_call.1} parent=27 // pred_region
          %188 = dma.done %s181, 128
        $region32: #{tpu_custom_call.1} parent=27 // pred_fallthru
          _
        %s189 = sand.u32 %s47, 1
        %s190 = scalar_lea.sflag [#allocation3], %s189
        %s191 = sand.u32 %s47, 1
        %s192 = smul.addr %s191, 8
        %s193 = scalar_lea.vmem [#allocation2], %s192
        %p194 = pneg %p60
        %p195 = pneg %p57
        %s196 = sadd.s32 %s22, %s23
        %s197 = smul.u32 2, %s196
        %p198 = scmp.lt.s32.totalorder %s21, 1
        %s199 = scalar_select %p198, %s21, 1
        %p200 = scmp.lt.s32.totalorder %s197, 1
        %s201 = scalar_select %p200, %s197, 1
        %s202 = smul.addr %s199, 2
        %s203 = sadd.s32 %s201, %s202
        %s204 = scalar_lea.vmem %s1, %s203
        %p205 = pneg %p90
        %p206 = pneg %p87
        %p207 = pneg %p118
        %p208 = pneg %p115
        %p209 = scmp.lt.s32.totalorder %s21, 1
        %s210 = scalar_select %p209, %s21, 1
        %p211 = scmp.lt.s32.totalorder %s22, 0
        %s212 = scalar_select %p211, %s22, 0
        %s213 = sadd.s32 %s212, %s210
        %s214 = smul.addr %s213, 4
        %s215 = scalar_lea.vmem %s2, %s214
        %s216 = sadd.s32 %s22, %s23
        %s217 = smul.u32 2, %s216
        %s218 = sadd.s32 %s22, %s23
        %s219 = smul.u32 2, %s218
        %p220 = scmp.lt.s32.totalorder %s21, 1
        %s221 = scalar_select %p220, %s21, 1
        %p222 = scmp.lt.s32.totalorder %s219, 1
        %s223 = scalar_select %p222, %s219, 1
        %s224 = smul.addr %s221, 2
        %s225 = sadd.s32 %s223, %s224
        %s226 = scalar_lea.vmem %s1, %s225
        %s227 = sadd.s32 %s22, %s23
        %s228 = smul.u32 2, %s227
        %p229 = scmp.lt.s32.totalorder %s21, 1
        %s230 = scalar_select %p229, %s21, 1
        %p231 = scmp.lt.s32.totalorder %s22, 0
        %s232 = scalar_select %p231, %s22, 0
        %s233 = sadd.s32 %s232, %s230
        %s234 = smul.addr %s233, 4
        %s235 = scalar_lea.vmem %s2, %s234
        %p236 = scmp.eq.s32.totalorder %s23, 0
        // Predicated region
        $region33: #{tpu_custom_call.1} parent=27 // pred_check
          %p237 = pneg %p236
        $region34: #{tpu_custom_call.1} parent=27 // pred_check_branch
          %239 = sbr.rel (%p237) target = $region36
        $region35: #{tpu_custom_call.1} parent=27 // pred_region
          %vm240 = vcmask 19456
          %241 = vst.msk [vmem:[%s235] sm:$0xf] %vm240, 0.0
        $region36: #{tpu_custom_call.1} parent=27 // pred_fallthru
          _
        %v242 = vld [vmem:[%s184] sm:$0xff]
        %v244 = vcombine.high %v242, %v242
        %vm246 = vcmask 1043456
        %v247 = vsel %vm246, %v242, -inf
        %v248 = vrot.slane %v247, 4
        %v249 = vmax.f32 %v247, %v248
        %v250 = vrot.slane %v249, 2
        %v251 = vmax.f32 %v249, %v250
        %v252 = vrot.slane %v251, 1
        %v253 = vmax.f32 %v251, %v252
        %v254 = vsel %vm246, %v244, -inf
        %v255 = vrot.slane %v254, 4
        %v256 = vmax.f32 %v254, %v255
        %v257 = vrot.slane %v256, 2
        %v258 = vmax.f32 %v256, %v257
        %v259 = vrot.slane %v258, 1
        %v260 = vmax.f32 %v258, %v259
        %v263 = vcombine.low %v253, %v260
        %v265 = vsub.f32 %v242, %v263
        %v266 = vmul.f32 %v265, 1.442695
        %v267 = vpow.pop %v266
        %v269 = vcombine.high %v267, %v267
        %v271 = vsel %vm246, %v267, 0.0
        %v272 = vrot.slane %v271, 4
        %v273 = vadd.f32 %v271, %v272
        %v274 = vrot.slane %v273, 2
        %v275 = vadd.f32 %v273, %v274
        %v276 = vrot.slane %v275, 1
        %v277 = vadd.f32 %v275, %v276
        %v278 = vsel %vm246, %v269, 0.0
        %v279 = vrot.slane %v278, 4
        %v280 = vadd.f32 %v278, %v279
        %v281 = vrot.slane %v280, 2
        %v282 = vadd.f32 %v280, %v281
        %v283 = vrot.slane %v282, 1
        %v284 = vadd.f32 %v282, %v283
        %v285 = vrcp.pop %v277
        %v286 = vrcp.pop %v284
        %v289 = vcombine.low %v285, %v286
        %v291 = vmul.f32 %v267, %v289
        %v292 = vld [vmem:[%s226] sm:$0x3]
        %v293 = vunpack.c.0.s8 %v292
        %v294 = vlaneseq
        %v295 = vshrl.u32 %v294, 7
        %v296 = vlaneseq
        %v297 = vshrl.u32 %v296, 7
        %v298 = vsub.s32 0, %v297
        %v299 = vrot.slane %v293, %v298
        %v300 = vlaneseq
        %v301 = vshrl.u32 %v300, 7
        %v302 = vsub.s32 4, %v301
        %v303 = vrot.slane %v293, %v302
        %v304 = vlaneseq
        %v305 = vshrl.u32 %v304, 7
        %v306 = vsub.s32 0, %v305
        %v307 = vrot.slane %v299, %v306
        %v308 = vlaneseq
        %v309 = vshrl.u32 %v308, 7
        %v310 = vsub.s32 0, %v309
        %v311 = vrot.slane %v303, %v310
        %vm312 = vcmp.eq.s32.totalorder %v307, %v295
        %vm313 = vcmp.eq.s32.totalorder %v311, %v295
        %v314 = vsel %vm312, 1, 0
        %v315 = vsel %vm313, 1, 0
        %v316 = vcvt.s32.f32 %v314
        %v317 = vcvt.s32.f32 %v315
        %v320 = vcombine.low %v316, %v317
        %v322 = vmul.f32 %v291, %v320
        %v324 = vcombine.high %v322, %v322
        %v326 = vsel %vm246, %v322, 0.0
        %v327 = vsel %vm246, %v324, 0.0
        %v328 = vadd.f32 %v326, %v327
        %329 = vadd.xlane.f32.xlu0 %v328
        %v330 = vpop.xlane.xlu0 %329
        %v332 = vcombine.high %v291, %v291
        %v334 = vsel %vm246, %v291, 0.0
        %v335 = vsel %vm246, %v332, 0.0
        %v336 = vadd.f32 %v334, %v335
        %337 = vadd.xlane.f32.xlu0 %v336
        %v338 = vpop.xlane.xlu0 %337
        %v339 = vsel %vm246, %v316, 0.0
        %v340 = vsel %vm246, %v317, 0.0
        %v341 = vadd.f32 %v339, %v340
        %342 = vadd.xlane.f32.xlu0 %v341
        %v343 = vpop.xlane.xlu0 %342
        %vm344 = vcmask 7168
        %v345 = vsel %vm344, %v330, %v338
        %vm346 = vcmask 15360
        %v347 = vsel %vm346, %v345, %v343
        %v348 = vld [vmem:[%s235] sm:$0xf]
        %v349 = vadd.f32 %v348, %v347
        %vm350 = vcmask 19456
        %351 = vst.msk [vmem:[%s235] sm:$0xf] %vm350, %v349
        %p352 = scmp.lt.s32.totalorder %s21, 1
        %s353 = scalar_select %p352, %s21, 1
        %p354 = scmp.lt.s32.totalorder %s22, 0
        %s355 = scalar_select %p354, %s22, 0
        %s356 = sadd.s32 %s355, %s353
        %s357 = smul.addr %s356, 4
        %s358 = scalar_lea.vmem %s2, %s357
        // Predicated region
        $region37: #{tpu_custom_call.1} parent=27 // pred_check
          %p359 = pneg %p115
        $region38: #{tpu_custom_call.1} parent=27 // pred_check_branch
          %361 = sbr.rel (%p359) target = $region40
        $region39: #{tpu_custom_call.1} parent=27 // pred_region
          _
        $region40: #{tpu_custom_call.1} parent=27 // pred_fallthru
          _
      $region28: #{tpu_custom_call.1} parent=5 // pred_fallthru
        _
      %p362 = scmp.le.s32.totalorder 2, %s11
      // Predicated region
      $region41: #{tpu_custom_call.1} parent=5 // pred_check
        %p363 = pneg %p362
      $region42: #{tpu_custom_call.1} parent=5 // pred_check_branch
        %365 = sbr.rel (%p363) target = $region44
      $region43: #{tpu_custom_call.1} parent=5 // pred_region
        %s366 = ssub.s32 %s11, 2
        // Predicated region
        $region45: #{tpu_custom_call.1} parent=43 // pred_check
          %p367 = pneg %p121
        $region46: #{tpu_custom_call.1} parent=43 // pred_check_branch
          %369 = sbr.rel (%p367) target = $region48
        $region47: #{tpu_custom_call.1} parent=43 // pred_region
          %p370 = scmp.lt.s32.totalorder %s24, 1
          %s371 = scalar_select %p370, %s24, 1
          %p372 = scmp.lt.s32.totalorder %s25, 0
          %s373 = scalar_select %p372, %s25, 0
          %s374 = sadd.s32 %s373, %s371
          %s375 = smul.addr %s374, 4
          %s376 = scalar_lea.vmem %s2, %s375
        $region48: #{tpu_custom_call.1} parent=43 // pred_fallthru
          _
      $region44: #{tpu_custom_call.1} parent=5 // pred_fallthru
        _
    $region6: #{tpu_custom_call.1} parent=1 // loop_footer
      %s15 = sadd.s32 1, %s11
    $region7: #{tpu_custom_call.1} parent=1 // loop_footer_branch
      %10 = sbr.rel target = $region3
    $region8: #{tpu_custom_call.1} parent=1 // loop_exit
      _
    %377 = vsyncpa [#allocation3], 1
    %s378 = scalar_lea.sflag [#allocation3], 1
    %379 = vsyncpa %s378, 1

</llo_original>
